<compile_context>
chip_gen: v6e
topology: v6e:2x2x1
jax: 0.10.0
libtpu: 0.0.40
codegen_flags: <defaults>
</compile_context>

<pallas_src>
import functools
import warnings

import jax
import jax.numpy as jnp
from jax.experimental import pallas as pl
from jax.experimental.pallas import tpu as pltpu


# ---------------------------------------------------------------------------
# kernel body (static config baked in, mirrors the torch `if self.*` branches)
# ---------------------------------------------------------------------------
def _make_equipment_kernel(num_states: int,
                           stochastic_repair: bool,
                           repair_probability: float,
                           stochastic_degrade: bool,
                           degrade_probability: float,
                           critical_error: bool,
                           critical_error_probability: float):
    top_state = num_states - 1

    def kernel(eq_ref, rand_ref, out_ref):
        eq = eq_ref[...]           # native equipment dtype, (tile_rows, lane)
        rnd = rand_ref[...]        # native randomness dtype
        top = jnp.asarray(top_state, dtype=eq.dtype)
        zero = jnp.asarray(0, dtype=eq.dtype)
        one = jnp.asarray(1, dtype=eq.dtype)

        pristine = eq == top
        damaged = eq == zero
        intermediate = jnp.logical_and(jnp.logical_not(pristine),
                                       jnp.logical_not(damaged))

        # --- repairs ---------------------------------------------------------
        if stochastic_repair:
            repairs = jnp.logical_and(damaged, rnd < repair_probability)
        else:
            repairs = damaged

        # --- critical errors -------------------------------------------------
        if critical_error:
            criticals = jnp.logical_and(pristine,
                                        rnd < critical_error_probability)

        # --- degradation (masks come from the *original* equipment, exactly as
        #     in the torch code, so a freshly repaired unit never degrades in
        #     the same step) ---------------------------------------------------
        if stochastic_degrade:
            degrades = jnp.logical_and(jnp.logical_or(pristine, intermediate),
                                       rnd < degrade_probability)
        else:
            degrades = jnp.logical_or(intermediate, pristine)
        if critical_error:
            degrades = jnp.logical_and(degrades, jnp.logical_not(criticals))

        # --- apply (masks are mutually disjoint, sequencing matches torch) ---
        new_eq = jnp.where(repairs, top, eq)
        if critical_error:
            new_eq = jnp.where(criticals, zero, new_eq)
        new_eq = jnp.where(degrades, new_eq - one, new_eq)

        out_ref[...] = new_eq.astype(out_ref.dtype)

    return kernel


# ---------------------------------------------------------------------------
# pure-jnp reference / small-problem & ragged-tail path
# ---------------------------------------------------------------------------
def _reference(equipment, rnd, *, num_states, stochastic_repair,
               repair_probability, stochastic_degrade, degrade_probability,
               critical_error, critical_error_probability):
    top = num_states - 1
    pristine = equipment == top
    damaged = equipment == 0
    intermediate = (~pristine) & (~damaged)
    repairs = (damaged & (rnd < repair_probability)) if stochastic_repair else damaged
    eq = jnp.where(repairs, top, equipment)
    if critical_error:
        criticals = pristine & (rnd < critical_error_probability)
        eq = jnp.where(criticals, 0, eq)
    if stochastic_degrade:
        degrades = (pristine | intermediate) & (rnd < degrade_probability)
    else:
        degrades = pristine | intermediate
    if critical_error:
        degrades = degrades & (~criticals)
    eq = jnp.where(degrades, eq - 1, eq)
    return eq.astype(equipment.dtype)


# ---------------------------------------------------------------------------
# helpers
# ---------------------------------------------------------------------------
def _round_up(x: int, m: int) -> int:
    return ((x + m - 1) // m) * m


def _pick_lane_width(n: int, cap: int) -> int:
    """Largest multiple of 128 that divides n (n must be a multiple of 128)."""
    best = 128
    lane = 128
    while lane <= cap:
        if n % lane == 0:
            best = lane
        lane += 128
    return best


def _default_max_tile_elements() -> int:
    # 2^19 elems -> 2 MiB f32/int32 tiles -> 3 arrays x 2 buffers = 12 MiB
    # (fits v5e's 16 MiB default scoped VMEM).  v6e/v7x (32 MiB scoped default)
    # get 2^20 elems -> 4 MiB tiles -> 24 MiB double-buffered.
    try:
        kind = jax.devices()[0].device_kind.lower()
    except Exception:
        return 1 << 19
    if ("v6" in kind) or ("v7" in kind) or ("trillium" in kind):
        return 1 << 20
    return 1 << 19


def _pallas_2d(eq2d, rnd2d, cfg, *, max_tile_elements, min_grid_steps):
    rows, lane = eq2d.shape
    eq_dt = jnp.dtype(eq2d.dtype)
    rnd_dt = jnp.dtype(rnd2d.dtype)
    # sublane multiple: (8,128) for 32-bit, (16,128) for 16-bit, (32,128) for 8-bit
    sub = max(8, 32 // eq_dt.itemsize, 32 // rnd_dt.itemsize)

    max_tile_rows = max(sub, (max_tile_elements // lane) // sub * sub)
    g = max(pl.cdiv(rows, max_tile_rows), min_grid_steps)
    g += g % 2                          # even #programs so v7x's 2 TCs both work
    tile_rows = _round_up(pl.cdiv(rows, g), sub)
    if tile_rows >= rows:
        tile_rows = rows                # single full-extent block (always legal)
        grid = 1
    else:
        grid = pl.cdiv(rows, tile_rows)  # ragged last block: OOB writes dropped

    block = (tile_rows, lane)
    n_elems = rows * lane
    cost = pl.CostEstimate(
        flops=10 * n_elems,
        transcendentals=0,
        bytes_accessed=n_elems * (2 * eq_dt.itemsize + rnd_dt.itemsize))

    return pl.pallas_call(
        _make_equipment_kernel(**cfg),
        out_shape=jax.ShapeDtypeStruct((rows, lane), eq2d.dtype),
        grid=(grid,),
        in_specs=[pl.BlockSpec(block, lambda i: (i, 0)),
                  pl.BlockSpec(block, lambda i: (i, 0))],
        out_specs=pl.BlockSpec(block, lambda i: (i, 0)),
        # Matches the torch in-place semantics; avoids a second HBM buffer.
        input_output_aliases={0: 0},
        compiler_params=pltpu.CompilerParams(
            dimension_semantics=("parallel",)),
        cost_estimate=cost,
    )(eq2d, rnd2d)


# ---------------------------------------------------------------------------
# wrapper: zero-copy lane-dense re-layout + balanced 1-D pipelined grid
# ---------------------------------------------------------------------------
@functools.partial(
    jax.jit,
    static_argnames=("num_states", "stochastic_repair", "repair_probability",
                     "stochastic_degrade", "degrade_probability",
                     "critical_error", "critical_error_probability",
                     "min_pallas_elements", "max_lane_width",
                     "max_tile_elements", "min_grid_steps"),
    donate_argnums=(0,))
def equipment_transition(equipment: jax.Array,
                         randomness_source: jax.Array,
                         *,
                         num_states: int,
                         stochastic_repair: bool,
                         repair_probability: float,
                         stochastic_degrade: bool,
                         degrade_probability: float,
                         critical_error: bool,
                         critical_error_probability: float,
                         min_pallas_elements: int = 1 << 18,
                         max_lane_width: int = 4096,
                         max_tile_elements: int | None = None,
                         min_grid_steps: int = 4) -> jax.Array:
    assert equipment.shape == randomness_source.shape
    assert max_lane_width % 128 == 0

    cfg = dict(num_states=num_states,
               stochastic_repair=stochastic_repair,
               repair_probability=repair_probability,
               stochastic_degrade=stochastic_degrade,
               degrade_probability=degrade_probability,
               critical_error=critical_error,
               critical_error_probability=critical_error_probability)

    n = equipment.size
    # Tiny problems: launch overhead dominates an elementwise op; fused XLA path.
    if n < min_pallas_elements or n < 128:
        return _reference(equipment, randomness_source, **cfg)

    if max_tile_elements is None:
        max_tile_elements = _default_max_tile_elements()

    orig_shape = equipment.shape
    eq_flat = equipment.reshape(-1)
    rnd_flat = randomness_source.reshape(-1)

    # Lane-aligned main part goes through Pallas (zero-copy reshape, native
    # dtypes, no padding); a <128-element ragged tail (if any) takes the jnp path.
    n_main = (n // 128) * 128
    lane = _pick_lane_width(n_main, max_lane_width)
    rows = n_main // lane

    eq_main = eq_flat if n_main == n else eq_flat[:n_main]
    rnd_main = rnd_flat if n_main == n else rnd_flat[:n_main]
    out_main = _pallas_2d(eq_main.reshape(rows, lane),
                          rnd_main.reshape(rows, lane),
                          cfg,
                          max_tile_elements=max_tile_elements,
                          min_grid_steps=min_grid_steps)
    out_flat = out_main.reshape(n_main)
    if n_main != n:
        tail = _reference(eq_flat[n_main:], rnd_flat[n_main:], **cfg)
        out_flat = jnp.concatenate([out_flat, tail])
    return out_flat.reshape(orig_shape)


# ---------------------------------------------------------------------------
# self-test
# ---------------------------------------------------------------------------
if __name__ == "__main__":
    warnings.filterwarnings("ignore", message=".*donated.*")

    # 3 equipment conditions: 0 = damaged, 1 = intermediate, 2 = pristine.
    cfg_stoch = dict(num_states=3,
                     stochastic_repair=True, repair_probability=0.5,
                     stochastic_degrade=True, degrade_probability=0.3,
                     critical_error=True, critical_error_probability=0.1)
    cfg_det = dict(num_states=3,
                   stochastic_repair=False, repair_probability=1.0,
                   stochastic_degrade=False, degrade_probability=1.0,
                   critical_error=False, critical_error_probability=0.0)

    cases = [
        # (shape, config, extra kwargs)
        ((8, 128),   cfg_stoch, dict(min_pallas_elements=0)),                       # single full-extent block
        ((64, 48),   cfg_det,   dict(min_pallas_elements=0, max_lane_width=128)),   # multi-step grid, exact division
        ((27, 128),  cfg_stoch, dict(min_pallas_elements=0, max_lane_width=128)),   # ragged last grid block
        ((10, 37),   cfg_stoch, dict(min_pallas_elements=0)),                       # ragged <128 tail via jnp + concat
        ((512, 512), cfg_stoch, {}),                                                # default dispatch -> Pallas path
        ((8, 16),    cfg_stoch, {}),                                                # default dispatch -> tiny jnp path
    ]

    root = jax.random.PRNGKey(0)
    keys = jax.random.split(root, 2 * len(cases))
    for idx, (shape, cfg, kw) in enumerate(cases):
        k_eq, k_rnd = keys[2 * idx], keys[2 * idx + 1]
        eq = jax.random.randint(k_eq, shape, 0, cfg["num_states"], dtype=jnp.int32)
        rnd = jax.random.uniform(k_rnd, shape, dtype=jnp.float32)
        # Compute the reference BEFORE the call: `eq` is donated (in-place contract).
        ref = jax.block_until_ready(_reference(eq, rnd, **cfg))
        out = jax.block_until_ready(equipment_transition(eq, rnd, **cfg, **kw))
        assert out.shape == shape and out.dtype == jnp.int32
        assert bool(jnp.all(out == ref)), f"mismatch for shape={shape} cfg={cfg}"

    print("KERNEL_OK")
</pallas_src>

<mosaic_0001>
module attributes {stable_mosaic.version = 11 : i64} {
  func.func @kernel(%arg0: i32, %arg1: memref<1x1024xi32, #tpu.memory_space<vmem>>, %arg2: memref<1x1024xf32, #tpu.memory_space<vmem>>, %arg3: memref<1x1024xi32, #tpu.memory_space<vmem>>) attributes {dimension_semantics = [#tpu.dimension_semantics<parallel>], iteration_bounds = array<i64: 1>, scalar_prefetch = 0 : i64, scratch_operands = 0 : i64, tpu.core_type = #tpu.core_type<tc>, window_params = [{transform_indices = @transform_0, window_bounds = array<i64: 1, 1024>}, {transform_indices = @transform_1, window_bounds = array<i64: 1, 1024>}, {transform_indices = @transform_2, window_bounds = array<i64: 1, 1024>}]} {
    %c0 = arith.constant 0 : index
    %c0_0 = arith.constant 0 : index
    %0 = vector.load %arg1[%c0, %c0_0] : memref<1x1024xi32, #tpu.memory_space<vmem>>, vector<1x1024xi32>
    %c0_1 = arith.constant 0 : index
    %c0_2 = arith.constant 0 : index
    %1 = vector.load %arg2[%c0_1, %c0_2] : memref<1x1024xf32, #tpu.memory_space<vmem>>, vector<1x1024xf32>
    %c2_i32 = arith.constant 2 : i32
    %2 = vector.broadcast %c2_i32 : i32 to vector<1x1024xi32>
    %3 = arith.cmpi eq, %0, %2 : vector<1x1024xi32>
    %c0_i32 = arith.constant 0 : i32
    %4 = vector.broadcast %c0_i32 : i32 to vector<1x1024xi32>
    %5 = arith.cmpi eq, %0, %4 : vector<1x1024xi32>
    %cst = arith.constant dense<true> : vector<1x1024xi1>
    %6 = arith.xori %3, %cst : vector<1x1024xi1>
    %cst_3 = arith.constant dense<true> : vector<1x1024xi1>
    %7 = arith.xori %5, %cst_3 : vector<1x1024xi1>
    %8 = arith.andi %6, %7 : vector<1x1024xi1>
    %cst_4 = arith.constant 5.000000e-01 : f32
    %9 = vector.broadcast %cst_4 : f32 to vector<1x1024xf32>
    %10 = arith.cmpf olt, %1, %9 : vector<1x1024xf32>
    %11 = arith.andi %5, %10 : vector<1x1024xi1>
    %cst_5 = arith.constant 1.000000e-01 : f32
    %12 = vector.broadcast %cst_5 : f32 to vector<1x1024xf32>
    %13 = arith.cmpf olt, %1, %12 : vector<1x1024xf32>
    %14 = arith.andi %3, %13 : vector<1x1024xi1>
    %15 = arith.ori %3, %8 : vector<1x1024xi1>
    %cst_6 = arith.constant 3.000000e-01 : f32
    %16 = vector.broadcast %cst_6 : f32 to vector<1x1024xf32>
    %17 = arith.cmpf olt, %1, %16 : vector<1x1024xf32>
    %18 = arith.andi %15, %17 : vector<1x1024xi1>
    %cst_7 = arith.constant dense<true> : vector<1x1024xi1>
    %19 = arith.xori %14, %cst_7 : vector<1x1024xi1>
    %20 = arith.andi %18, %19 : vector<1x1024xi1>
    %c2_i32_8 = arith.constant 2 : i32
    %21 = vector.broadcast %c2_i32_8 : i32 to vector<1x1024xi32>
    %22 = arith.select %11, %21, %0 : vector<1x1024xi1>, vector<1x1024xi32>
    %c0_i32_9 = arith.constant 0 : i32
    %23 = vector.broadcast %c0_i32_9 : i32 to vector<1x1024xi32>
    %24 = arith.select %14, %23, %22 : vector<1x1024xi1>, vector<1x1024xi32>
    %c1_i32 = arith.constant 1 : i32
    %25 = vector.broadcast %c1_i32 : i32 to vector<1x1024xi32>
    %26 = arith.subi %24, %25 : vector<1x1024xi32>
    %27 = arith.select %20, %26, %24 : vector<1x1024xi1>, vector<1x1024xi32>
    %c0_10 = arith.constant 0 : index
    %c0_11 = arith.constant 0 : index
    %28 = vector.load %arg3[%c0_10, %c0_11] : memref<1x1024xi32, #tpu.memory_space<vmem>>, vector<1x1024xi32>
    tpu.vector_store %arg3[%c0_10, %c0_11], %27 {strides = array<i32>} : memref<1x1024xi32, #tpu.memory_space<vmem>>, vector<1x1024xi32>,
    return
  }
  func.func @transform_0(%arg0: i32) -> (i32, i32) {
    %c0_i32 = arith.constant 0 : i32
    %c0_i32_0 = arith.constant 0 : i32
    return %arg0, %c0_i32 : i32, i32
  }
  func.func @transform_1(%arg0: i32) -> (i32, i32) {
    %c0_i32 = arith.constant 0 : i32
    %c0_i32_0 = arith.constant 0 : i32
    return %arg0, %c0_i32 : i32, i32
  }
  func.func @transform_2(%arg0: i32) -> (i32, i32) {
    %c0_i32 = arith.constant 0 : i32
    %c0_i32_0 = arith.constant 0 : i32
    return %arg0, %c0_i32 : i32, i32
  }
}

</mosaic_0001>

<llo_original>
// kernel: equipment_transition.1
$region0: #{equipment_transition.1}
  #allocation0 [shape = 'u32[]', space=smem, size = 0x4, offset = 0x4, fixed_abs, tag = 'smem constant byte address 0x4 - core index']
  #allocation1 [shape = 'u32[144,128]{1,0:T(1,128)}', space=vmem, size = 0x12000, scoped, tag = 'internal scratch']
  %s0 = inlined_call_operand.hbm [shape: s32[1,1024], index: 0, kind: input, shape index: {}, may-alias: {0,2}]
  %s1 = inlined_call_operand.hbm [shape: f32[1,1024], index: 1, kind: input, shape index: {}]
  %s2 = inlined_call_operand.hbm [shape: s32[1,1024], index: 2, kind: output, shape index: {}, may-alias: {0,2}]
  %s3 = sld [smem:[#allocation0]]
  $region26: #{equipment_transition.1} parent=0
    _
  %s5 = ssub.s32 1, %s3
  %s6 = scalar_select 0, %s5, %s3
  $region1: #{equipment_transition.1} parent=0
    #allocation2 [shape = 'u8[4096]{0}', space=vmem, size = 0x1000, scoped, tag = 'input window, operand 0, single buffered']
    #allocation3 [shape = 's32[1]{0}', space=sflag, size = 0x4, scoped, tag = 'scoped memory for equipment_transition.1']
    #allocation4 [shape = 's32[1]{0}', space=sflag, size = 0x4, scoped, tag = 'scoped memory for equipment_transition.1']
    #allocation5 [shape = 'u8[4096]{0}', space=vmem, size = 0x1000, scoped, tag = 'input window, operand 1, single buffered']
    #allocation6 [shape = 's32[1]{0}', space=sflag, size = 0x4, scoped, tag = 'scoped memory for equipment_transition.1']
    #allocation7 [shape = 'u8[4096]{0}', space=vmem, size = 0x1000, scoped, tag = 'output window, operand 0, single buffered']
    %7 = vsyncpa [#allocation3], 0
    %8 = vsyncpa [#allocation6], 0
    %9 = vsyncpa [#allocation4], 0
    // Predicated region
    $region2: #{equipment_transition.1} parent=1 // pred_check
      _
    $region3: #{equipment_transition.1} parent=1 // pred_check_branch
      %11 = sbr.rel (0) target = $region5
    $region4: #{equipment_transition.1} parent=1 // pred_region
      %s13 = ssub.s32 128, 128
      %14 = vsyncadd [#allocation3], %s13
      %s16 = sshll.u32 [#allocation2], 4
      %s17 = int_to_ptr.vmem [resolvable:$true] %s16
      %19 = dma.hbm_to_vmem [thread:$0]  %s0, 128, %s17, [#allocation3]
    $region5: #{equipment_transition.1} parent=1 // pred_fallthru
      _
    // Predicated region
    $region6: #{equipment_transition.1} parent=1 // pred_check
      _
    $region7: #{equipment_transition.1} parent=1 // pred_check_branch
      %21 = sbr.rel (0) target = $region9
    $region8: #{equipment_transition.1} parent=1 // pred_region
      %s23 = ssub.s32 128, 128
      %24 = vsyncadd [#allocation6], %s23
      %s26 = sshll.u32 [#allocation5], 4
      %s27 = int_to_ptr.vmem [resolvable:$true] %s26
      %29 = dma.hbm_to_vmem [thread:$0]  %s1, 128, %s27, [#allocation6]
    $region9: #{equipment_transition.1} parent=1 // pred_fallthru
      _
    // Predicated region
    $region10: #{equipment_transition.1} parent=1 // pred_check
      _
    $region11: #{equipment_transition.1} parent=1 // pred_check_branch
      %31 = sbr.rel (0) target = $region13
    $region12: #{equipment_transition.1} parent=1 // pred_region
      %32 = dma.done [#allocation3], 128
    $region13: #{equipment_transition.1} parent=1 // pred_fallthru
      _
    // Predicated region
    $region14: #{equipment_transition.1} parent=1 // pred_check
      _
    $region15: #{equipment_transition.1} parent=1 // pred_check_branch
      %34 = sbr.rel (0) target = $region17
    $region16: #{equipment_transition.1} parent=1 // pred_region
      %35 = dma.done [#allocation6], 128
    $region17: #{equipment_transition.1} parent=1 // pred_fallthru
      _
    %v36 = vld [vmem:[#allocation2] sm:$0xff]
    %v37 = vld [vmem:[#allocation5] sm:$0xff]
    %vm38 = vcmp.eq.s32.totalorder %v36, 2
    %vm39 = vcmp.eq.s32.totalorder %v36, 0
    %vm40 = vmxor %vm38, 1
    %vm41 = vmxor %vm39, 1
    %vm42 = vmand %vm40, %vm41
    %vm43 = vcmp.lt.f32.partialorder %v37, 0.5
    %vm44 = vmand %vm39, %vm43
    %vm45 = vcmp.lt.f32.partialorder %v37, 0.1
    %vm46 = vmand %vm38, %vm45
    %vm47 = vmor %vm38, %vm42
    %vm48 = vcmp.lt.f32.partialorder %v37, 0.3
    %vm49 = vmand %vm47, %vm48
    %vm50 = vmxor %vm46, 1
    %vm51 = vmand %vm49, %vm50
    %v52 = vsel %vm44, 2, %v36
    %v53 = vsel %vm46, 0, %v52
    %v54 = vsub.s32 %v53, 1
    %v55 = vsel %vm51, %v54, %v53
    %56 = vst [vmem:[#allocation7] sm:$0xff] %v55
    // Predicated region
    $region18: #{equipment_transition.1} parent=1 // pred_check
      _
    $region19: #{equipment_transition.1} parent=1 // pred_check_branch
      %58 = sbr.rel (0) target = $region21
    $region20: #{equipment_transition.1} parent=1 // pred_region
      %s60 = ssub.s32 128, 128
      %61 = vsyncadd [#allocation4], %s60
      %s63 = sshll.u32 [#allocation7], 4
      %s64 = int_to_ptr.vmem [resolvable:$true] %s63
      %66 = dma.vmem_to_hbm [thread:$0]  %s64, 128, %s2, [#allocation4]
    $region21: #{equipment_transition.1} parent=1 // pred_fallthru
      _
    // Predicated region
    $region22: #{equipment_transition.1} parent=1 // pred_check
      _
    $region23: #{equipment_transition.1} parent=1 // pred_check_branch
      %68 = sbr.rel (0) target = $region25
    $region24: #{equipment_transition.1} parent=1 // pred_region
      %69 = dma.done [#allocation4], 128
    $region25: #{equipment_transition.1} parent=1 // pred_fallthru
      _
    %70 = vsyncpa [#allocation3], 1
    %71 = vsyncpa [#allocation6], 1
    %72 = vsyncpa [#allocation4], 1

</llo_original>
